<compile_context>
chip_gen: v5e
topology: v5e:2x2
jax: 0.10.0
libtpu: 0.0.40
codegen_flags: <defaults>
</compile_context>

<pallas_src>
import jax
import jax.numpy as jnp
from jax.experimental import pallas as pl
from jax.experimental.pallas import tpu as pltpu


def _silu_gate(x, w1, wg, w2_dtype):
    """silu(x @ w1) * (x @ wg), f32 math, cast to the down-proj operand dtype."""
    h1 = jnp.dot(x, w1, preferred_element_type=jnp.float32)   # (tm, tf) f32
    g = jnp.dot(x, wg, preferred_element_type=jnp.float32)    # (tm, tf) f32
    # silu(h1) = h1 * sigmoid(h1); exp + approx reciprocal both land on the EUP
    # slot, keeping VALU slots free (kernel is MXU/DMA bound anyway).
    silu = h1 * pl.reciprocal(1.0 + jnp.exp(-h1), approx=True)
    return (silu * g).astype(w2_dtype)


def _swiglu_kernel_acc(x_ref, w1_ref, wg_ref, w2_ref, o_ref, acc_ref):
    """Generic path: f32 VMEM accumulator, cast to out dtype on the last ffn step."""
    f = pl.program_id(1)
    inter = _silu_gate(x_ref[...], w1_ref[...], wg_ref[...], w2_ref.dtype)
    part = jnp.dot(inter, w2_ref[...], preferred_element_type=jnp.float32)

    @pl.when(f == 0)
    def _init():
        acc_ref[...] = part          # fold init into the first step (no zero store + reload)

    @pl.when(f > 0)
    def _accum():
        acc_ref[...] += part

    @pl.when(f == pl.num_programs(1) - 1)
    def _finalize():
        o_ref[...] = acc_ref[...].astype(o_ref.dtype)


def _swiglu_kernel_direct(x_ref, w1_ref, wg_ref, w2_ref, o_ref):
    """No-scratch path: accumulate straight into the (VMEM-resident) output tile.

    Used when the output dtype is f32 (lossless accumulation) or when there is a
    single ffn tile (no cross-step accumulation at all).
    """
    f = pl.program_id(1)
    inter = _silu_gate(x_ref[...], w1_ref[...], wg_ref[...], w2_ref.dtype)
    part = jnp.dot(inter, w2_ref[...], preferred_element_type=jnp.float32)

    @pl.when(f == 0)
    def _init():
        o_ref[...] = part.astype(o_ref.dtype)

    @pl.when(f > 0)
    def _accum():
        o_ref[...] = (o_ref[...].astype(jnp.float32) + part).astype(o_ref.dtype)


def _round_up(x, m):
    return ((x + m - 1) // m) * m


def _pick_tiles(tm, tf):
    """Per-generation defaults keyed off the chip's VMEM capacity."""
    try:
        cap = int(pltpu.get_tpu_info().vmem_capacity_bytes)
    except Exception:
        cap = 64 << 20  # conservative (v7x-sized) fallback
    big_vmem = cap >= (100 << 20)          # v5e / v6e: 128 MiB, v7x: 64 MiB
    if tm is None:
        tm = 512 if big_vmem else 384
    if tf is None:
        tf = 1024 if big_vmem else 512
    return tm, tf, cap


def mixtral_swiglu_mlp(hidden_states, w1_t, gate_t, w2_t, *,
                       tm=None, tf=None, compute_dtype=jnp.bfloat16):
    """SwiGLU MLP:  (silu(x @ w1_t) * (x @ gate_t)) @ w2_t.

    hidden_states: (B, S, H);  w1_t / gate_t: (H, F);  w2_t: (F, H).
    tm: token tile (None -> auto: 512 on 128 MiB-VMEM chips, 384 on v7x).
    tf: ffn tile streamed per grid step (None -> auto: 1024 / 512 respectively).
    """
    B, S, H = hidden_states.shape
    Hw, F = w1_t.shape
    assert Hw == H and gate_t.shape == (H, F) and w2_t.shape == (F, H)

    out_dtype = hidden_states.dtype
    x = hidden_states.reshape(B * S, H)
    T = B * S

    tm, tf, vmem_cap = _pick_tiles(tm, tf)

    # ---- token tiling (pad x only; never the weights, if avoidable) ---------
    tm = max(8, min(tm, _round_up(T, 8)))
    # TODO(synk): on v7x (2 TCs) cap tm so the parallel token axis has >=2 blocks
    # for medium batches; needs reliable chip-version detection.
    T_pad = _round_up(T, tm)
    if T_pad != T:
        x = jnp.pad(x, ((0, T_pad - T), (0, 0)))

    # ---- ffn tiling: prefer a tile that divides F so weights are never padded
    tf = min(tf, F)
    if F % tf != 0:
        c = (tf // 128) * 128
        while c >= 128 and F % c != 0:
            c -= 128
        if c >= 128:
            tf = c
    F_pad = _round_up(F, tf)
    nf = F_pad // tf
    assert nf == 1 or tf % 128 == 0, "tf must be a multiple of 128 when F > tf"
    if F_pad != F:
        # Rare fallback; zero-padded ffn columns contribute silu(0)*0 == 0 -> exact.
        w1_t = jnp.pad(w1_t, ((0, 0), (0, F_pad - F)))
        gate_t = jnp.pad(gate_t, ((0, 0), (0, F_pad - F)))
        w2_t = jnp.pad(w2_t, ((0, F_pad - F), (0, 0)))

    # ---- dtype policy (store weights pre-cast to compute_dtype to skip this) --
    x_c = x.astype(compute_dtype)
    w1_c = w1_t if w1_t.dtype == compute_dtype else w1_t.astype(compute_dtype)
    wg_c = gate_t if gate_t.dtype == compute_dtype else gate_t.astype(compute_dtype)
    w2_c = w2_t if w2_t.dtype == compute_dtype else w2_t.astype(compute_dtype)

    use_direct = (jnp.dtype(out_dtype) == jnp.dtype(jnp.float32)) or (nf == 1)

    # ---- VMEM budget (double-buffered tiles + f32 intermediates [+ scratch]) --
    itc = jnp.dtype(compute_dtype).itemsize
    ito = jnp.dtype(out_dtype).itemsize
    est = 2 * (tm * H * itc            # x tile
               + 2 * H * tf * itc      # w1 + gate tiles
               + tf * H * itc          # w2 tile
               + tm * H * ito)         # output tile
    est += 3 * tm * tf * 4             # in-kernel f32 intermediates (h1, g, silu*g)
    if not use_direct:
        est += tm * H * 4              # f32 accumulator scratch
    vmem_limit = int(min(max(est + (8 << 20), 32 << 20), vmem_cap))

    kernel = _swiglu_kernel_direct if use_direct else _swiglu_kernel_acc
    scratch = [] if use_direct else [pltpu.VMEM((tm, H), jnp.float32)]

    out = pl.pallas_call(
        kernel,
        out_shape=jax.ShapeDtypeStruct((T_pad, H), out_dtype),
        grid_spec=pltpu.PrefetchScalarGridSpec(
            num_scalar_prefetch=0,
            grid=(T_pad // tm, nf),
            in_specs=[
                pl.BlockSpec((tm, H), lambda i, f: (i, 0)),    # x (resident over f)
                pl.BlockSpec((H, tf), lambda i, f: (0, f)),    # w1 tile
                pl.BlockSpec((H, tf), lambda i, f: (0, f)),    # gate tile
                pl.BlockSpec((tf, H), lambda i, f: (f, 0)),    # w2 tile
            ],
            out_specs=pl.BlockSpec((tm, H), lambda i, f: (i, 0)),
            scratch_shapes=scratch,
        ),
        compiler_params=pltpu.CompilerParams(
            dimension_semantics=("parallel", "arbitrary"),
            vmem_limit_bytes=vmem_limit,
        ),
    )(x_c, w1_c, wg_c, w2_c)

    return out[:T].reshape(B, S, H)


def _reference(hidden_states, w1_t, gate_t, w2_t, compute_dtype=jnp.bfloat16):
    """Pure-JAX reference with the same dtype policy as the kernel."""
    cd = compute_dtype
    x = hidden_states.astype(cd)
    h1 = jnp.dot(x, w1_t.astype(cd), preferred_element_type=jnp.float32)
    g = jnp.dot(x, gate_t.astype(cd), preferred_element_type=jnp.float32)
    inter = (jax.nn.silu(h1) * g).astype(cd)
    out = jnp.dot(inter, w2_t.astype(cd), preferred_element_type=jnp.float32)
    return out.astype(hidden_states.dtype)


if __name__ == "__main__":
    # Small shapes consistent with the module: input_size=32, widening_factor=2.
    batch, seq, hidden, widening = 2, 8, 32, 2
    ffn = hidden * widening

    key = jax.random.PRNGKey(0)
    kx, k1, kg, k2 = jax.random.split(key, 4)

    x = jax.random.normal(kx, (batch, seq, hidden), dtype=jnp.float32)
    # Deterministic "PyTorch-style" weights, stored pre-transposed as (in, out).
    w1_t = jax.random.normal(k1, (hidden, ffn), dtype=jnp.float32) * 0.05
    gate_t = jax.random.normal(kg, (hidden, ffn), dtype=jnp.float32) * 0.05
    w2_t = jax.random.normal(k2, (ffn, hidden), dtype=jnp.float32) * 0.05

    out = mixtral_swiglu_mlp(x, w1_t, gate_t, w2_t)
    out = jax.block_until_ready(out)

    ref = _reference(x, w1_t, gate_t, w2_t, compute_dtype=jnp.bfloat16)
    assert out.shape == (batch, seq, hidden)
    max_err = float(jnp.max(jnp.abs(out - ref)))
    assert jnp.allclose(out, ref, atol=5e-3, rtol=5e-2), \
        f"mismatch vs reference, max abs err {max_err}"

    print("KERNEL_OK")
</pallas_src>

<mosaic_0001>
module attributes {stable_mosaic.version = 11 : i64} {
  func.func @_swiglu_kernel_direct(%arg0: i32, %arg1: i32, %arg2: memref<16x32xbf16, #tpu.memory_space<vmem>>, %arg3: memref<32x64xbf16, #tpu.memory_space<vmem>>, %arg4: memref<32x64xbf16, #tpu.memory_space<vmem>>, %arg5: memref<64x32xbf16, #tpu.memory_space<vmem>>, %arg6: memref<16x32xf32, #tpu.memory_space<vmem>>) attributes {dimension_semantics = [#tpu.dimension_semantics<parallel>, #tpu.dimension_semantics<arbitrary>], iteration_bounds = array<i64: 1, 1>, scalar_prefetch = 0 : i64, scratch_operands = 0 : i64, tpu.core_type = #tpu.core_type<tc>, window_params = [{transform_indices = @transform_0, window_bounds = array<i64: 16, 32>}, {transform_indices = @transform_1, window_bounds = array<i64: 32, 64>}, {transform_indices = @transform_2, window_bounds = array<i64: 32, 64>}, {transform_indices = @transform_3, window_bounds = array<i64: 64, 32>}, {transform_indices = @transform_4, window_bounds = array<i64: 16, 32>}]} {
    %c0 = arith.constant 0 : index
    %c0_0 = arith.constant 0 : index
    %0 = vector.load %arg2[%c0, %c0_0] : memref<16x32xbf16, #tpu.memory_space<vmem>>, vector<16x32xbf16>
    %c0_1 = arith.constant 0 : index
    %c0_2 = arith.constant 0 : index
    %1 = vector.load %arg3[%c0_1, %c0_2] : memref<32x64xbf16, #tpu.memory_space<vmem>>, vector<32x64xbf16>
    %c0_3 = arith.constant 0 : index
    %c0_4 = arith.constant 0 : index
    %2 = vector.load %arg4[%c0_3, %c0_4] : memref<32x64xbf16, #tpu.memory_space<vmem>>, vector<32x64xbf16>
    %cst = arith.constant dense<0.000000e+00> : vector<16x64xf32>
    %3 = tpu.matmul %0, %1, %cst {dimension_numbers = #tpu.dot_dimension_numbers<[1], [0], [0], [1], [0, 0, 1, 1], [], []>} : vector<16x32xbf16>, vector<32x64xbf16>, vector<16x64xf32> -> vector<16x64xf32>
    %cst_5 = arith.constant dense<0.000000e+00> : vector<16x64xf32>
    %4 = tpu.matmul %0, %2, %cst_5 {dimension_numbers = #tpu.dot_dimension_numbers<[1], [0], [0], [1], [0, 0, 1, 1], [], []>} : vector<16x32xbf16>, vector<32x64xbf16>, vector<16x64xf32> -> vector<16x64xf32>
    %cst_6 = arith.constant 0.000000e+00 : f32
    %5 = vector.broadcast %cst_6 : f32 to vector<16x64xf32>
    %6 = arith.subf %5, %3 : vector<16x64xf32>
    %7 = math.exp %6 : vector<16x64xf32>
    %cst_7 = arith.constant 1.000000e+00 : f32
    %8 = vector.broadcast %cst_7 : f32 to vector<16x64xf32>
    %9 = arith.addf %8, %7 : vector<16x64xf32>
    %10 = tpu.reciprocal %9 {approx = true} : vector<16x64xf32> -> vector<16x64xf32>
    %11 = arith.mulf %3, %10 : vector<16x64xf32>
    %12 = arith.mulf %11, %4 : vector<16x64xf32>
    %13 = arith.truncf %12 : vector<16x64xf32> to vector<16x64xbf16>
    %c0_8 = arith.constant 0 : index
    %c0_9 = arith.constant 0 : index
    %14 = vector.load %arg5[%c0_8, %c0_9] : memref<64x32xbf16, #tpu.memory_space<vmem>>, vector<64x32xbf16>
    %cst_10 = arith.constant dense<0.000000e+00> : vector<16x32xf32>
    %15 = tpu.matmul %13, %14, %cst_10 {dimension_numbers = #tpu.dot_dimension_numbers<[1], [0], [0], [1], [0, 0, 1, 1], [], []>} : vector<16x64xbf16>, vector<64x32xbf16>, vector<16x32xf32> -> vector<16x32xf32>
    %c0_i32 = arith.constant 0 : i32
    %16 = arith.cmpi eq, %arg1, %c0_i32 : i32
    %17 = arith.extui %16 : i1 to i32
    %c0_i32_11 = arith.constant 0 : i32
    %18 = arith.cmpi ne, %17, %c0_i32_11 : i32
    scf.if %18 {
      %c0_14 = arith.constant 0 : index
      %c0_15 = arith.constant 0 : index
      %22 = vector.load %arg6[%c0_14, %c0_15] : memref<16x32xf32, #tpu.memory_space<vmem>>, vector<16x32xf32>
      tpu.vector_store %arg6[%c0_14, %c0_15], %15 {strides = array<i32>} : memref<16x32xf32, #tpu.memory_space<vmem>>, vector<16x32xf32>,
    } else {
    }
    %c0_i32_12 = arith.constant 0 : i32
    %19 = arith.cmpi sgt, %arg1, %c0_i32_12 : i32
    %20 = arith.extui %19 : i1 to i32
    %c0_i32_13 = arith.constant 0 : i32
    %21 = arith.cmpi ne, %20, %c0_i32_13 : i32
    scf.if %21 {
      %c0_14 = arith.constant 0 : index
      %c0_15 = arith.constant 0 : index
      %22 = vector.load %arg6[%c0_14, %c0_15] : memref<16x32xf32, #tpu.memory_space<vmem>>, vector<16x32xf32>
      %23 = arith.addf %22, %15 : vector<16x32xf32>
      %c0_16 = arith.constant 0 : index
      %c0_17 = arith.constant 0 : index
      %24 = vector.load %arg6[%c0_16, %c0_17] : memref<16x32xf32, #tpu.memory_space<vmem>>, vector<16x32xf32>
      tpu.vector_store %arg6[%c0_16, %c0_17], %23 {strides = array<i32>} : memref<16x32xf32, #tpu.memory_space<vmem>>, vector<16x32xf32>,
    } else {
    }
    return
  }
  func.func @transform_0(%arg0: i32, %arg1: i32) -> (i32, i32) {
    %c0_i32 = arith.constant 0 : i32
    %c0_i32_0 = arith.constant 0 : i32
    return %arg0, %c0_i32 : i32, i32
  }
  func.func @transform_1(%arg0: i32, %arg1: i32) -> (i32, i32) {
    %c0_i32 = arith.constant 0 : i32
    %c0_i32_0 = arith.constant 0 : i32
    return %c0_i32, %arg1 : i32, i32
  }
  func.func @transform_2(%arg0: i32, %arg1: i32) -> (i32, i32) {
    %c0_i32 = arith.constant 0 : i32
    %c0_i32_0 = arith.constant 0 : i32
    return %c0_i32, %arg1 : i32, i32
  }
  func.func @transform_3(%arg0: i32, %arg1: i32) -> (i32, i32) {
    %c0_i32 = arith.constant 0 : i32
    %c0_i32_0 = arith.constant 0 : i32
    return %arg1, %c0_i32 : i32, i32
  }
  func.func @transform_4(%arg0: i32, %arg1: i32) -> (i32, i32) {
    %c0_i32 = arith.constant 0 : i32
    %c0_i32_0 = arith.constant 0 : i32
    return %arg0, %c0_i32 : i32, i32
  }
}

</mosaic_0001>

<llo_original>
// kernel: tpu_custom_call.1
$region0: #{tpu_custom_call.1}
  #allocation0 [shape = 'u32[]', space=smem, size = 0x4, offset = 0x4, fixed_abs, tag = 'smem constant byte address 0x4 - core index']
  #allocation1 [shape = 'u32[72,128]{1,0:T(1,128)}', space=vmem, size = 0x9000, scoped, tag = 'internal scratch']
  %s0 = inlined_call_operand.vmem [shape: bf16[16,32], index: 0, kind: input, shape index: {}]
  %s1 = inlined_call_operand.vmem [shape: bf16[32,64], index: 1, kind: input, shape index: {}]
  %s2 = inlined_call_operand.vmem [shape: bf16[32,64], index: 2, kind: input, shape index: {}]
  %s3 = inlined_call_operand.vmem [shape: bf16[64,32], index: 3, kind: input, shape index: {}]
  %s4 = inlined_call_operand.hbm [shape: f32[16,32], index: 4, kind: output, shape index: {}]
  %s5 = sld [smem:[#allocation0]]
  $region34: #{tpu_custom_call.1} parent=0
    _
  %s7 = ssub.s32 1, %s5
  %s8 = scalar_select 0, %s7, %s5
  $region1: #{tpu_custom_call.1} parent=0
    #allocation2 [shape = 'u8[8192]{0}', space=vmem, size = 0x2000, scoped, tag = 'output window, operand 0, single buffered']
    #allocation3 [shape = 's32[1]{0}', space=sflag, size = 0x4, scoped, tag = 'scoped memory for tpu_custom_call.1']
    %9 = vsyncpa [#allocation3], 0
    // Predicated region
    $region2: #{tpu_custom_call.1} parent=1 // pred_check
      _
    $region3: #{tpu_custom_call.1} parent=1 // pred_check_branch
      %11 = sbr.rel (0) target = $region5
    $region4: #{tpu_custom_call.1} parent=1 // pred_region
      _
    $region5: #{tpu_custom_call.1} parent=1 // pred_fallthru
      _
    // Predicated region
    $region6: #{tpu_custom_call.1} parent=1 // pred_check
      _
    $region7: #{tpu_custom_call.1} parent=1 // pred_check_branch
      %13 = sbr.rel (0) target = $region9
    $region8: #{tpu_custom_call.1} parent=1 // pred_region
      _
    $region9: #{tpu_custom_call.1} parent=1 // pred_fallthru
      _
    // Predicated region
    $region10: #{tpu_custom_call.1} parent=1 // pred_check
      _
    $region11: #{tpu_custom_call.1} parent=1 // pred_check_branch
      %15 = sbr.rel (0) target = $region13
    $region12: #{tpu_custom_call.1} parent=1 // pred_region
      _
    $region13: #{tpu_custom_call.1} parent=1 // pred_fallthru
      _
    // Predicated region
    $region14: #{tpu_custom_call.1} parent=1 // pred_check
      _
    $region15: #{tpu_custom_call.1} parent=1 // pred_check_branch
      %17 = sbr.rel (0) target = $region17
    $region16: #{tpu_custom_call.1} parent=1 // pred_region
      _
    $region17: #{tpu_custom_call.1} parent=1 // pred_fallthru
      _
    %v19 = vld [vmem:[%s0] sm:$0xf]
    %v20 = vld [vmem:[%s0 + $0x4] sm:$0xf]
    %v21 = vld [vmem:[%s1] sm:$0xf]
    %v22 = vld [vmem:[%s1 + $0x4] sm:$0xf]
    %v23 = vld [vmem:[%s1 + $0x8] sm:$0xf]
    %v24 = vld [vmem:[%s1 + $0xc] sm:$0xf]
    %v25 = vld [vmem:[%s2] sm:$0xf]
    %v26 = vld [vmem:[%s2 + $0x4] sm:$0xf]
    %v27 = vld [vmem:[%s2 + $0x8] sm:$0xf]
    %v28 = vld [vmem:[%s2 + $0xc] sm:$0xf]
    %v31 = vunpack.c.l.b16 %v19
    %v32 = vunpack.c.l.b16 %v20
    %v33 = vpack.c.b16 %v32, %v31
    %v38 = vunpack.c.l.b16 %v21
    %v39 = vunpack.c.l.b16 %v22
    %v40 = vunpack.c.l.b16 %v23
    %v41 = vunpack.c.l.b16 %v24
    %v42 = vpack.c.b16 %v39, %v38
    %v43 = vpack.c.b16 %v41, %v40
    %vm46 = vcmask 261120
    %v48 = vsel %vm46, %v33, 0
    %50 = vmatpush.bf16.msra.mxu0 0
    %51 = vmatpush.bf16.msra.mxu0 0
    %52 = vmatpush.bf16.msra.mxu0 0
    %53 = vmatpush.bf16.msra.mxu0 0
    %54 = vmatpush.bf16.msra.mxu0 0
    %55 = vmatpush.bf16.msra.mxu0 0
    %56 = vmatpush.bf16.msra.mxu0 %v43
    %57 = vmatpush.bf16.msra.mxu0 %v42
    %58 = vmatmul.bf16.gmra.mxu0 %v48
    %v59 = vpop.f32.mrf.mxu0
    %v60 = vadd.f32 0.0, %v59
    %v61 = vpop.f32.mrf.mxu0
    %v62 = vadd.f32 0.0, %v61
    %63 = vdwg.mxu0
    %v68 = vunpack.c.l.b16 %v25
    %v69 = vunpack.c.l.b16 %v26
    %v70 = vunpack.c.l.b16 %v27
    %v71 = vunpack.c.l.b16 %v28
    %v72 = vpack.c.b16 %v69, %v68
    %v73 = vpack.c.b16 %v71, %v70
    %76 = vmatpush.bf16.msra.mxu0 0
    %77 = vmatpush.bf16.msra.mxu0 0
    %78 = vmatpush.bf16.msra.mxu0 0
    %79 = vmatpush.bf16.msra.mxu0 0
    %80 = vmatpush.bf16.msra.mxu0 0
    %81 = vmatpush.bf16.msra.mxu0 0
    %82 = vmatpush.bf16.msra.mxu0 %v73
    %83 = vmatpush.bf16.msra.mxu0 %v72
    %84 = vmatmul.bf16.gmra.mxu0 %v48
    %v85 = vpop.f32.mrf.mxu0
    %v86 = vadd.f32 0.0, %v85
    %v87 = vpop.f32.mrf.mxu0
    %v88 = vadd.f32 0.0, %v87
    %89 = vdwg.mxu0
    %v90 = vsub.f32 0.0, %v60
    %v91 = vsub.f32 0.0, %v62
    %v92 = vmul.f32 %v90, 1.442695
    %v93 = vpow.pop %v92
    %v94 = vmul.f32 %v91, 1.442695
    %v95 = vpow.pop %v94
    %v96 = vadd.f32 %v93, 1.0
    %v97 = vadd.f32 %v95, 1.0
    %v98 = vrcp.pop %v96
    %v99 = vrcp.pop %v97
    %v100 = vmul.f32 %v60, %v98
    %v101 = vmul.f32 %v62, %v99
    %v102 = vmul.f32 %v100, %v86
    %v103 = vmul.f32 %v101, %v88
    %v104 = vpack.c.bf16 %v103, %v102
    %v105 = vld [vmem:[%s3] sm:$0xf]
    %v106 = vld [vmem:[%s3 + $0x4] sm:$0xf]
    %v107 = vld [vmem:[%s3 + $0x8] sm:$0xf]
    %v108 = vld [vmem:[%s3 + $0xc] sm:$0xf]
    %v109 = vld [vmem:[%s3 + $0x10] sm:$0xf]
    %v110 = vld [vmem:[%s3 + $0x14] sm:$0xf]
    %v111 = vld [vmem:[%s3 + $0x18] sm:$0xf]
    %v112 = vld [vmem:[%s3 + $0x1c] sm:$0xf]
    %v121 = vunpack.c.l.b16 %v105
    %v122 = vunpack.c.l.b16 %v106
    %v123 = vunpack.c.l.b16 %v107
    %v124 = vunpack.c.l.b16 %v108
    %v125 = vunpack.c.l.b16 %v109
    %v126 = vunpack.c.l.b16 %v110
    %v127 = vunpack.c.l.b16 %v111
    %v128 = vunpack.c.l.b16 %v112
    %v129 = vpack.c.b16 %v122, %v121
    %v130 = vpack.c.b16 %v124, %v123
    %v131 = vpack.c.b16 %v126, %v125
    %v132 = vpack.c.b16 %v128, %v127
    %vm137 = vcmask 523264
    %v139 = vsel %vm137, %v104, 0
    %141 = vmatpush.bf16.msra.mxu0 0
    %142 = vmatpush.bf16.msra.mxu0 0
    %143 = vmatpush.bf16.msra.mxu0 0
    %144 = vmatpush.bf16.msra.mxu0 0
    %145 = vmatpush.bf16.msra.mxu0 %v132
    %146 = vmatpush.bf16.msra.mxu0 %v131
    %147 = vmatpush.bf16.msra.mxu0 %v130
    %148 = vmatpush.bf16.msra.mxu0 %v129
    %149 = vmatmul.bf16.gmra.mxu0 %v139
    %v150 = vpop.f32.mrf.mxu0
    %v151 = vadd.f32 0.0, %v150
    %v152 = vpop.f32.mrf.mxu0
    %v153 = vadd.f32 0.0, %v152
    %154 = vdwg.mxu0
    %p155 = scmp.eq.s32.totalorder 0, 0
    // Predicated region
    $region18: #{tpu_custom_call.1} parent=1 // pred_check
      %p156 = pneg %p155
    $region19: #{tpu_custom_call.1} parent=1 // pred_check_branch
      %158 = sbr.rel (%p156) target = $region21
    $region20: #{tpu_custom_call.1} parent=1 // pred_region
      %159 = vst.msk [vmem:[#allocation2] sm:$0xff] %vm46, %v151
      %160 = vst.msk [vmem:[#allocation2 + $0x8] sm:$0xff] %vm46, %v153
    $region21: #{tpu_custom_call.1} parent=1 // pred_fallthru
      _
    %p161 = scmp.gt.s32.totalorder 0, 0
    // Predicated region
    $region22: #{tpu_custom_call.1} parent=1 // pred_check
      %p162 = pneg %p161
    $region23: #{tpu_custom_call.1} parent=1 // pred_check_branch
      %164 = sbr.rel (%p162) target = $region25
    $region24: #{tpu_custom_call.1} parent=1 // pred_region
      %v165 = vld [vmem:[#allocation2] sm:$0xff]
      %v166 = vld [vmem:[#allocation2 + $0x8] sm:$0xff]
      %v167 = vadd.f32 %v165, %v151
      %v168 = vadd.f32 %v166, %v153
      %169 = vst.msk [vmem:[#allocation2] sm:$0xff] %vm46, %v167
      %170 = vst.msk [vmem:[#allocation2 + $0x8] sm:$0xff] %vm46, %v168
    $region25: #{tpu_custom_call.1} parent=1 // pred_fallthru
      _
    // Predicated region
    $region26: #{tpu_custom_call.1} parent=1 // pred_check
      _
    $region27: #{tpu_custom_call.1} parent=1 // pred_check_branch
      %172 = sbr.rel (0) target = $region29
    $region28: #{tpu_custom_call.1} parent=1 // pred_region
      %174 = vsyncadd [#allocation3], 0
      %s175 = sshll.u32 [#allocation2], 4
      %s176 = int_to_ptr.vmem [resolvable:$true] %s175
      %s177 = sshll.u32 %s4, 4
      %s178 = int_to_ptr.hbm [resolvable:$true] %s177
      %183 = dma.vmem_to_hbm [thread:$0]  %s176, 256, %s178, [#allocation3], 128, 128, 8
    $region29: #{tpu_custom_call.1} parent=1 // pred_fallthru
      _
    // Predicated region
    $region30: #{tpu_custom_call.1} parent=1 // pred_check
      _
    $region31: #{tpu_custom_call.1} parent=1 // pred_check_branch
      %185 = sbr.rel (0) target = $region33
    $region32: #{tpu_custom_call.1} parent=1 // pred_region
      %187 = dma.done [#allocation3], 256
    $region33: #{tpu_custom_call.1} parent=1 // pred_fallthru
      _
    %188 = vsyncpa [#allocation3], 1

</llo_original>
